<compile_context>
chip_gen: v7x
topology: tpu7x:2x2x1
jax: 0.10.0
libtpu: 0.0.40
codegen_flags: <defaults>
</compile_context>

<pallas_src>
import functools

import jax
import jax.numpy as jnp
from jax.experimental import pallas as pl
from jax.experimental.pallas import tpu as pltpu

_LANE = 128
_NEG = -1e30


def _round_up(x, m):
    return (x + m - 1) // m * m


def _leaky_relu(x, slope=0.2):
    return jnp.where(x > 0, x, slope * x)


def _elu(x):
    return jnp.where(x > 0, x, jnp.exp(x) - 1.0)


def _vmem_limit_bytes():
    # Generation-aware scoped-VMEM limit: ~75% of physical capacity, capped at
    # 112 MiB (v5e/v6e: 128 MiB -> 96 MiB limit; v7x: 64 MiB -> 48 MiB limit).
    cap = 64 * 1024 * 1024
    try:
        cap = int(getattr(pltpu.get_tpu_info(), "vmem_capacity_bytes", cap))
    except Exception:
        pass
    return max(32 * 1024 * 1024, min(int(cap * 0.75), 112 * 1024 * 1024))


def _choose_row_tile(n, dp, vmem_limit):
    # Largest row tile whose per-step live bytes fit the budget left after the
    # resident operands (bf16 h_proj + a_srcT + bias).
    #   per step ~ 2x double-buffered int8 adj tile + f32/bf16 score/exp temps
    #              + double-buffered output / dest-row tiles.
    resident = n * dp * 2 + n * 8 * 4 + dp * 8
    budget = max(vmem_limit - resident, 2 * 1024 * 1024)
    n_cap = _round_up(n, 8)
    for tr in (1024, 512, 256, 128, 64, 32, 16, 8):
        if tr > n_cap:
            continue
        per_step = tr * n * 12 + tr * dp * 12
        if per_step <= budget:
            return tr
    return 8


# ----------------------------------------------------------------------------
# Kernels
# ----------------------------------------------------------------------------
def _linear_kernel(x_ref, w_ref, o_ref):
    # One destination-row tile: [TR, K] @ [K, DP] bf16 -> f32 acc -> bf16 store.
    o_ref[...] = jnp.dot(x_ref[...], w_ref[...],
                         preferred_element_type=jnp.float32).astype(o_ref.dtype)


def _gat_attention_kernel(adj_ref, hf_ref, asrcT_ref, b_ref, o_ref, *,
                          heads, hid, adst_col0, ones_col, out_ones_col,
                          apply_elu, num_classes):
    """One destination-row tile of a dense GATConv.

    adj_ref   : [TR, N]   int8 {0,1}, adj[i, j] = 1 iff edge j -> i
    hf_ref    : [N, DP]   bf16 resident projection; columns =
                          [per-head W x | ones | a_src per head | a_dst per head | pad]
    asrcT_ref : [H, N]    f32 resident source scores (transposed in the wrapper)
    b_ref     : [1, DP]   f32 bias (data columns only)
    o_ref     : [TR, DP]  output tile (bf16 for layer 1, f32 for the final layer)
    """
    tr, dp = o_ref.shape
    final = num_classes is not None
    row0 = pl.multiple_of(pl.program_id(0) * tr, 8)

    # Neighbour mask built once per tile and reused by every head (no f32
    # additive-mask temporary is kept live).
    neigh = adj_ref[...].astype(jnp.float32) > 0.0            # [TR, N] bool

    hf = hf_ref[...]                                           # [N, DP] bf16
    ht = hf_ref[pl.ds(row0, tr), :]                            # [TR, DP] dest rows
    col_ids = jax.lax.broadcasted_iota(jnp.int32, (tr, dp), 1)

    out = jnp.zeros((tr, dp), jnp.float32)
    for hd in range(heads):
        a_src = asrcT_ref[hd:hd + 1, :]                        # [1, N] f32 (hoisted)
        a_dst = ht[:, adst_col0 + hd:adst_col0 + hd + 1].astype(jnp.float32)  # [TR,1]
        # e[i, j] = LeakyReLU(a_dst[i] + a_src[j]) on neighbours, -1e30 elsewhere.
        e = jnp.where(neigh, _leaky_relu(a_dst + a_src), _NEG)  # [TR, N] f32
        m = jnp.max(e, axis=-1, keepdims=True)
        # bf16 exp (EUP) -> p is already the MXU operand dtype; masked entries
        # underflow to exactly 0.
        p = jnp.exp((e - m).astype(jnp.bfloat16))               # [TR, N] bf16
        # Full-width aggregation (same MXU passes as the narrow head slice);
        # the ones-column of hf gives the softmax denominator for free.
        acc = jnp.dot(p, hf, preferred_element_type=jnp.float32)  # [TR, DP] f32
        s = acc[:, ones_col:ones_col + 1]                       # [TR, 1]  sum_j p
        inv_s = pl.reciprocal(s, approx=not final)
        head_cols = (col_ids >= hd * hid) & (col_ids < (hd + 1) * hid)
        # Select-accumulate into one lane-dense block (no concat relayout, no
        # narrow per-head stores; acc dies each iteration).
        out = out + jnp.where(head_cols, acc * inv_s, 0.0)

    out = out + b_ref[...]
    if apply_elu:
        out = _elu(out)
    if out_ones_col is not None:
        # Emit an all-ones column so the next layer's projection can reproduce
        # its own ones / denominator column.
        out = jnp.where(col_ids == out_ones_col, 1.0, out)
    if final:
        # log_softmax over the real class columns only (padding masked out).
        valid = col_ids < num_classes
        z = jnp.where(valid, out, _NEG)
        m2 = jnp.max(z, axis=-1, keepdims=True)
        zz = z - m2
        lse = jnp.log(jnp.sum(jnp.where(valid, jnp.exp(zz), 0.0),
                              axis=-1, keepdims=True))
        out = jnp.where(valid, zz - lse, 0.0)

    o_ref[...] = out.astype(o_ref.dtype)


# ----------------------------------------------------------------------------
# pallas_call wrappers
# ----------------------------------------------------------------------------
def _linear(x, w, *, row_tile, vmem_limit):
    n, k = x.shape
    m = w.shape[1]
    return pl.pallas_call(
        _linear_kernel,
        out_shape=jax.ShapeDtypeStruct((n, m), jnp.bfloat16),
        grid=(n // row_tile,),
        in_specs=[pl.BlockSpec((row_tile, k), lambda i: (i, 0)),
                  pl.BlockSpec((k, m), lambda i: (0, 0))],
        out_specs=pl.BlockSpec((row_tile, m), lambda i: (i, 0)),
        compiler_params=pltpu.CompilerParams(
            dimension_semantics=("parallel",),
            vmem_limit_bytes=vmem_limit),
    )(x, w)


def _gat_attention(adj_i8, h_proj, asrcT, bias, *, heads, hid, adst_col0,
                   ones_col, out_ones_col, apply_elu, num_classes,
                   out_dtype, row_tile, vmem_limit):
    n_pad = adj_i8.shape[0]
    dp = h_proj.shape[1]
    kernel = functools.partial(
        _gat_attention_kernel, heads=heads, hid=hid, adst_col0=adst_col0,
        ones_col=ones_col, out_ones_col=out_ones_col, apply_elu=apply_elu,
        num_classes=num_classes)
    return pl.pallas_call(
        kernel,
        out_shape=jax.ShapeDtypeStruct((n_pad, dp), out_dtype),
        grid=(n_pad // row_tile,),
        in_specs=[
            pl.BlockSpec((row_tile, n_pad), lambda i: (i, 0)),   # int8 adj row tile
            pl.BlockSpec((n_pad, dp), lambda i: (0, 0)),         # resident bf16 h_proj
            pl.BlockSpec(asrcT.shape, lambda i: (0, 0)),         # resident [H, N] scores
            pl.BlockSpec(bias.shape, lambda i: (0, 0)),          # [1, DP] bias
        ],
        out_specs=pl.BlockSpec((row_tile, dp), lambda i: (i, 0)),
        compiler_params=pltpu.CompilerParams(
            dimension_semantics=("parallel",),
            vmem_limit_bytes=vmem_limit),
    )(adj_i8, h_proj, asrcT, bias)


# ----------------------------------------------------------------------------
# Parameter packing (dense head packing + augmented score/ones columns).
# ----------------------------------------------------------------------------
def _pack_params(params, num_features, hidden_dim, num_heads, num_classes):
    F, hid, H, C = num_features, hidden_dim, num_heads, num_classes
    d1 = H * hid
    F1P = _round_up(F + 1, _LANE)            # input feature width (+ ones column)
    D1P = _round_up(d1 + 1 + 2 * H, _LANE)   # layer-1 projection width
    D2P = _round_up(C + 1 + 2, _LANE)        # layer-2 projection width

    ones1_in = F               # ones column in x_pad
    ones1 = d1                 # ones column in h1_proj / h1
    asrc1_0 = d1 + 1           # per-head a_src columns in h1_proj
    adst1_0 = d1 + 1 + H       # per-head a_dst columns in h1_proj
    ones2 = C
    asrc2 = C + 1
    adst2 = C + 2

    w1, as1, ad1 = params['w1'], params['as1'], params['ad1']
    w1a = jnp.zeros((F1P, D1P), jnp.float32)
    w1a = w1a.at[:F, :d1].set(w1)
    w1a = w1a.at[ones1_in, ones1].set(1.0)
    for h in range(H):
        wh = w1[:, h * hid:(h + 1) * hid]
        w1a = w1a.at[:F, asrc1_0 + h].set(wh @ as1[h])
        w1a = w1a.at[:F, adst1_0 + h].set(wh @ ad1[h])
    b1p = jnp.zeros((1, D1P), jnp.float32).at[:, :d1].set(params['b1'])

    w2, as2, ad2 = params['w2'], params['as2'][0], params['ad2'][0]
    w2a = jnp.zeros((D1P, D2P), jnp.float32)
    w2a = w2a.at[:d1, :C].set(w2)
    w2a = w2a.at[ones1, ones2].set(1.0)      # ones column propagates layer 1 -> 2
    w2a = w2a.at[:d1, asrc2].set(w2 @ as2)
    w2a = w2a.at[:d1, adst2].set(w2 @ ad2)
    b2p = jnp.zeros((1, D2P), jnp.float32).at[:, :C].set(params['b2'])

    return dict(w1=w1a.astype(jnp.bfloat16), b1=b1p,
                w2=w2a.astype(jnp.bfloat16), b2=b2p,
                F1P=F1P, D1P=D1P, D2P=D2P,
                ones1_in=ones1_in, ones1=ones1, asrc1_0=asrc1_0, adst1_0=adst1_0,
                ones2=ones2, asrc2=asrc2, adst2=adst2)


# ----------------------------------------------------------------------------
# Full model forward
# ----------------------------------------------------------------------------
def gat_forward(x, adj, params, *, num_heads, hidden_dim, num_classes,
                row_tile=None):
    n, f_in = x.shape
    pk = _pack_params(params, f_in, hidden_dim, num_heads, num_classes)
    F1P, D1P, D2P = pk['F1P'], pk['D1P'], pk['D2P']

    vmem_limit = _vmem_limit_bytes()
    if row_tile is None:
        row_tile = _choose_row_tile(n, max(D1P, D2P), vmem_limit)
    if row_tile % 8 != 0:
        raise ValueError("row_tile must be a multiple of 8")
    n_pad = _round_up(n, row_tile)

    # x padded (rows to n_pad, lanes to F1P) with an all-ones input column.
    x_pad = jnp.zeros((n_pad, F1P), jnp.bfloat16)
    x_pad = x_pad.at[:n, :f_in].set(x.astype(jnp.bfloat16))
    x_pad = x_pad.at[:, pk['ones1_in']].set(1.0)

    # int8 adjacency: the only O(N^2) HBM stream. Padded rows/cols are zero.
    adj_i8 = jnp.zeros((n_pad, n_pad), jnp.int8)
    adj_i8 = adj_i8.at[:n, :n].set((adj > 0).astype(jnp.int8))

    # x = dropout(x) -> identity in eval mode.
    h1_proj = _linear(x_pad, pk['w1'], row_tile=row_tile,
                      vmem_limit=vmem_limit)                       # [Np, D1P] bf16
    asrc1T = h1_proj[:, pk['asrc1_0']:pk['asrc1_0'] + num_heads] \
        .astype(jnp.float32).T                                     # [H, Np]
    h1 = _gat_attention(adj_i8, h1_proj, asrc1T, pk['b1'],
                        heads=num_heads, hid=hidden_dim,
                        adst_col0=pk['adst1_0'], ones_col=pk['ones1'],
                        out_ones_col=pk['ones1'], apply_elu=True,
                        num_classes=None, out_dtype=jnp.bfloat16,
                        row_tile=row_tile, vmem_limit=vmem_limit)  # [Np, D1P] bf16
    # h1 = dropout(h1) -> identity in eval mode.
    h2_proj = _linear(h1, pk['w2'], row_tile=row_tile,
                      vmem_limit=vmem_limit)                       # [Np, D2P] bf16
    asrc2T = h2_proj[:, pk['asrc2']:pk['asrc2'] + 1] \
        .astype(jnp.float32).T                                     # [1, Np]
    out_pad = _gat_attention(adj_i8, h2_proj, asrc2T, pk['b2'],
                             heads=1, hid=num_classes,
                             adst_col0=pk['adst2'], ones_col=pk['ones2'],
                             out_ones_col=None, apply_elu=False,
                             num_classes=num_classes, out_dtype=jnp.float32,
                             row_tile=row_tile, vmem_limit=vmem_limit)
    return out_pad[:n, :num_classes]


def make_params(key, num_features, hidden_dim, num_heads, num_classes):
    ks = jax.random.split(key, 6)

    def glorot(k, shape):
        lim = (6.0 / (shape[0] + shape[1])) ** 0.5
        return jax.random.uniform(k, shape, jnp.float32, -lim, lim)

    return dict(
        w1=glorot(ks[0], (num_features, num_heads * hidden_dim)),
        as1=glorot(ks[1], (num_heads, hidden_dim)),
        ad1=glorot(ks[2], (num_heads, hidden_dim)),
        b1=jnp.zeros((1, num_heads * hidden_dim), jnp.float32),
        w2=glorot(ks[3], (num_heads * hidden_dim, num_classes)),
        as2=glorot(ks[4], (1, num_classes)),
        ad2=glorot(ks[5], (1, num_classes)),
        b2=jnp.zeros((1, num_classes), jnp.float32),
    )


# ----------------------------------------------------------------------------
# Pure-JAX reference (eval-mode PyG GATConv semantics) for validation.
# ----------------------------------------------------------------------------
def _gat_layer_ref(x, adj, w, att_src, att_dst, bias, heads, out_dim, concat):
    h = x @ w
    outs = []
    for hd in range(heads):
        hh = h[:, hd * out_dim:(hd + 1) * out_dim]
        a_src = hh @ att_src[hd]
        a_dst = hh @ att_dst[hd]
        e = a_dst[:, None] + a_src[None, :]
        e = jnp.where(e > 0, e, 0.2 * e)
        e = jnp.where(adj > 0, e, _NEG)
        alpha = jax.nn.softmax(e, axis=-1)
        outs.append(alpha @ hh)
    out = jnp.concatenate(outs, -1) if concat else sum(outs) / float(heads)
    return out + bias


def _gat_reference(x, adj, params, *, num_heads, hidden_dim, num_classes):
    h1 = _gat_layer_ref(x, adj, params['w1'], params['as1'], params['ad1'],
                        params['b1'], num_heads, hidden_dim, True)
    h1 = jnp.where(h1 > 0, h1, jnp.exp(h1) - 1.0)
    h2 = _gat_layer_ref(h1, adj, params['w2'], params['as2'], params['ad2'],
                        params['b2'], 1, num_classes, False)
    return jax.nn.log_softmax(h2, axis=-1)


if __name__ == "__main__":
    N, F_IN, HEADS, HIDDEN, CLASSES = 16, 8, 2, 8, 4

    key = jax.random.PRNGKey(0)
    kx, kp = jax.random.split(key, 2)

    x = jax.random.normal(kx, (N, F_IN), jnp.float32)

    # Deterministic ring graph, both directions: edge_index[0]=source, [1]=target.
    idx = jnp.arange(N)
    src = jnp.concatenate([idx, (idx + 1) % N])
    dst = jnp.concatenate([(idx + 1) % N, idx])
    edge_index = jnp.stack([src, dst]).astype(jnp.int32)  # [2, E]

    # Dense adjacency with self loops: adj[i, j] = 1 iff edge j -> i (glue).
    adj = jnp.zeros((N, N), jnp.float32).at[edge_index[1], edge_index[0]].set(1.0)
    adj = adj.at[idx, idx].set(1.0)

    params = make_params(kp, F_IN, HIDDEN, HEADS, CLASSES)

    # row_tile=8 -> grid=(2,) so the row-tiled/pipelined path is exercised.
    out = gat_forward(x, adj, params, num_heads=HEADS, hidden_dim=HIDDEN,
                      num_classes=CLASSES, row_tile=8)
    out = jax.block_until_ready(out)

    assert out.shape == (N, CLASSES)
    assert bool(jnp.all(jnp.isfinite(out)))
    row_sums = jnp.sum(jnp.exp(out), axis=1)  # log_softmax rows -> probs sum to 1
    assert bool(jnp.all(jnp.abs(row_sums - 1.0) < 2e-3))

    # Tolerance accounts for end-to-end bf16 (projections, h, p, adjacency) and
    # the approximate reciprocal in the hidden layer (~1e-2-level logit error).
    ref = _gat_reference(x, adj, params, num_heads=HEADS, hidden_dim=HIDDEN,
                         num_classes=CLASSES)
    err = float(jnp.max(jnp.abs(out - ref)))
    assert err < 0.15, f"max abs err vs reference: {err}"

    print("KERNEL_OK")
</pallas_src>

<mosaic_0001>
module attributes {stable_mosaic.version = 11 : i64} {
  func.func @_linear_kernel(%arg0: i32, %arg1: memref<8x128xbf16, #tpu.memory_space<vmem>>, %arg2: memref<128x128xbf16, #tpu.memory_space<vmem>>, %arg3: memref<8x128xbf16, #tpu.memory_space<vmem>>) attributes {dimension_semantics = [#tpu.dimension_semantics<parallel>], iteration_bounds = array<i64: 2>, scalar_prefetch = 0 : i64, scratch_operands = 0 : i64, tpu.core_type = #tpu.core_type<tc>, window_params = [{transform_indices = @transform_0, window_bounds = array<i64: 8, 128>}, {pipeline_mode = #tpu.pipeline_mode<synchronous>, transform_indices = @transform_1, window_bounds = array<i64: 128, 128>}, {transform_indices = @transform_2, window_bounds = array<i64: 8, 128>}]} {
    %c0 = arith.constant 0 : index
    %c0_0 = arith.constant 0 : index
    %0 = vector.load %arg1[%c0, %c0_0] : memref<8x128xbf16, #tpu.memory_space<vmem>>, vector<8x128xbf16>
    %c0_1 = arith.constant 0 : index
    %c0_2 = arith.constant 0 : index
    %1 = vector.load %arg2[%c0_1, %c0_2] : memref<128x128xbf16, #tpu.memory_space<vmem>>, vector<128x128xbf16>
    %cst = arith.constant dense<0.000000e+00> : vector<8x128xf32>
    %2 = tpu.matmul %0, %1, %cst {dimension_numbers = #tpu.dot_dimension_numbers<[1], [0], [0], [1], [0, 0, 1, 1], [], []>} : vector<8x128xbf16>, vector<128x128xbf16>, vector<8x128xf32> -> vector<8x128xf32>
    %3 = arith.truncf %2 : vector<8x128xf32> to vector<8x128xbf16>
    %c0_3 = arith.constant 0 : index
    %c0_4 = arith.constant 0 : index
    %4 = vector.load %arg3[%c0_3, %c0_4] : memref<8x128xbf16, #tpu.memory_space<vmem>>, vector<8x128xbf16>
    tpu.vector_store %arg3[%c0_3, %c0_4], %3 {strides = array<i32>} : memref<8x128xbf16, #tpu.memory_space<vmem>>, vector<8x128xbf16>,
    return
  }
  func.func @transform_0(%arg0: i32) -> (i32, i32) {
    %c0_i32 = arith.constant 0 : i32
    %c0_i32_0 = arith.constant 0 : i32
    return %arg0, %c0_i32 : i32, i32
  }
  func.func @transform_1(%arg0: i32) -> (i32, i32) {
    %c0_i32 = arith.constant 0 : i32
    %c0_i32_0 = arith.constant 0 : i32
    %c0_i32_1 = arith.constant 0 : i32
    return %c0_i32, %c0_i32_0 : i32, i32
  }
  func.func @transform_2(%arg0: i32) -> (i32, i32) {
    %c0_i32 = arith.constant 0 : i32
    %c0_i32_0 = arith.constant 0 : i32
    return %arg0, %c0_i32 : i32, i32
  }
}

</mosaic_0001>

<llo_original>
// kernel: tpu_custom_call.1
$region0: #{tpu_custom_call.1}
  #allocation0 [shape = 'u32[]', space=smem, size = 0x4, offset = 0x4, fixed_abs, tag = 'smem constant byte address 0x4 - core index']
  #allocation1 [shape = 'u32[144,128]{1,0:T(1,128)}', space=vmem, size = 0x12000, scoped, tag = 'internal scratch']
  %s0 = inlined_call_operand.hbm [shape: bf16[16,128], index: 0, kind: input, shape index: {}]
  %s1 = inlined_call_operand.hbm [shape: bf16[128,128], index: 1, kind: input, shape index: {}]
  %s2 = inlined_call_operand.hbm [shape: bf16[16,128], index: 2, kind: output, shape index: {}]
  %s3 = sld [smem:[#allocation0]]
  $region49: #{tpu_custom_call.1} parent=0
    _
  %s5 = ssub.s32 1, %s3
  %s6 = scalar_select 0, %s5, %s3
  $region1: #{tpu_custom_call.1} parent=0
    #allocation2 [shape = 'u8[4096]{0}', space=vmem, size = 0x1000, scoped, tag = 'input window, operand 0']
    #allocation3 [shape = 's32[2]{0}', space=sflag, size = 0x8, scoped, tag = 'scoped memory for tpu_custom_call.1']
    #allocation4 [shape = 's32[2]{0}', space=sflag, size = 0x8, scoped, tag = 'scoped memory for tpu_custom_call.1']
    #allocation5 [shape = 'u8[32768]{0}', space=vmem, size = 0x8000, scoped, tag = 'input window, operand 1, single buffered']
    #allocation6 [shape = 's32[1]{0}', space=sflag, size = 0x4, scoped, tag = 'scoped memory for tpu_custom_call.1']
    #allocation7 [shape = 'u8[4096]{0}', space=vmem, size = 0x1000, scoped, tag = 'output window, operand 0']
    %7 = vsyncpa [#allocation3], 0
    %s8 = scalar_lea.sflag [#allocation3], 1
    %9 = vsyncpa %s8, 0
    %10 = vsyncpa [#allocation6], 0
    %11 = vsyncpa [#allocation4], 0
    %s12 = scalar_lea.sflag [#allocation4], 1
    %13 = vsyncpa %s12, 0
    loop: start=0, step=1, limit=4
    $region2: #{tpu_custom_call.1} parent=1 // loop_pre_header
      _
    $region3: #{tpu_custom_call.1} parent=1 // loop_header
      %s15 = sphi 0, %s19
      %p16 = scmp.ge.s32.totalorder %s15, 4
      %s25 = sphi 0, %s27
      %s28 = sphi 0, %s25
      %s29 = sphi 0, %s28
      %s45 = sphi 0, %s29
      %s49 = sphi 0, %s49
      %s51 = sphi 0, %s49
      %s52 = sphi 0, %s51
      %s66 = sphi 0, %s52
      %s72 = sphi 0, %s74
      %s75 = sphi 0, %s72
      %s76 = sphi 0, %s75
      %s92 = sphi 0, %s76
    $region4: #{tpu_custom_call.1} parent=1 // loop_header_branch
      %18 = sbr.rel (%p16) target = $region8
    $region5: #{tpu_custom_call.1} parent=1 // loop_body
      %s20 = ssub.s32 %s15, 1
      %s21 = ssub.s32 %s15, 2
      %s22 = sadd.s32 %s15, 1
      %s23 = ssub.s32 %s15, %s22
      %p24 = scmp.eq.s32.totalorder %s23, 0
      %s26 = sadd.s32 %s25, 1
      %s27 = scalar_select %p24, %s25, %s26
      %p30 = pneg %p24
      %p31 = scmp.eq.s32.totalorder %s15, 1
      %p32 = por %p30, %p31
      %p33 = scmp.ne.s32.totalorder %s25, %s28
      %p34 = scmp.eq.s32.totalorder %s15, 0
      %p35 = por %p33, %p34
      %p36 = scmp.ne.s32.totalorder %s25, %s28
      %p37 = scmp.eq.s32.totalorder %s20, 1
      %p38 = por %p36, %p37
      %p39 = scmp.ne.s32.totalorder %s28, %s29
      %p40 = scmp.eq.s32.totalorder %s20, 0
      %p41 = por %p39, %p40
      %p42 = scmp.ne.s32.totalorder %s28, %s29
      %p43 = scmp.eq.s32.totalorder %s21, 1
      %p44 = por %p42, %p43
      %p46 = scmp.ne.s32.totalorder %s29, %s45
      %p47 = scmp.eq.s32.totalorder %s21, 0
      %p48 = por %p46, %p47
      %s50 = sadd.s32 %s49, 1
      %p53 = scmp.eq.s32.totalorder %s15, 1
      %p54 = scmp.ne.s32.totalorder %s49, %s51
      %p55 = scmp.eq.s32.totalorder %s15, 0
      %p56 = por %p54, %p55
      %p57 = scmp.ne.s32.totalorder %s49, %s51
      %p58 = scmp.eq.s32.totalorder %s20, 1
      %p59 = por %p57, %p58
      %p60 = scmp.ne.s32.totalorder %s51, %s52
      %p61 = scmp.eq.s32.totalorder %s20, 0
      %p62 = por %p60, %p61
      %p63 = scmp.ne.s32.totalorder %s51, %s52
      %p64 = scmp.eq.s32.totalorder %s21, 1
      %p65 = por %p63, %p64
      %p67 = scmp.ne.s32.totalorder %s52, %s66
      %p68 = scmp.eq.s32.totalorder %s21, 0
      %p69 = por %p67, %p68
      %s70 = ssub.s32 %s15, %s22
      %p71 = scmp.eq.s32.totalorder %s70, 0
      %s73 = sadd.s32 %s72, 1
      %s74 = scalar_select %p71, %s72, %s73
      %p77 = pneg %p71
      %p78 = scmp.eq.s32.totalorder %s15, 1
      %p79 = por %p77, %p78
      %p80 = scmp.ne.s32.totalorder %s72, %s75
      %p81 = scmp.eq.s32.totalorder %s15, 0
      %p82 = por %p80, %p81
      %p83 = scmp.ne.s32.totalorder %s72, %s75
      %p84 = scmp.eq.s32.totalorder %s20, 1
      %p85 = por %p83, %p84
      %p86 = scmp.ne.s32.totalorder %s75, %s76
      %p87 = scmp.eq.s32.totalorder %s20, 0
      %p88 = por %p86, %p87
      %p89 = scmp.ne.s32.totalorder %s75, %s76
      %p90 = scmp.eq.s32.totalorder %s21, 1
      %p91 = por %p89, %p90
      %p93 = scmp.ne.s32.totalorder %s76, %s92
      %p94 = scmp.eq.s32.totalorder %s21, 0
      %p95 = por %p93, %p94
      %p96 = scmp.le.s32.totalorder 1, %s15
      %p97 = scmp.lt.s32.totalorder %s15, 3
      %p98 = pnand %p96, %p97
      %p99 = pneg %p98
      // Predicated region
      $region9: #{tpu_custom_call.1} parent=5 // pred_check
        _
      $region10: #{tpu_custom_call.1} parent=5 // pred_check_branch
        %101 = sbr.rel (%p98) target = $region12
      $region11: #{tpu_custom_call.1} parent=5 // pred_region
        %s102 = ssub.s32 %s15, 1
        // Predicated region
        $region13: #{tpu_custom_call.1} parent=11 // pred_check
          %p103 = pneg %p62
        $region14: #{tpu_custom_call.1} parent=11 // pred_check_branch
          %105 = sbr.rel (%p103) target = $region16
        $region15: #{tpu_custom_call.1} parent=11 // pred_region
          %s107 = ssub.s32 1024, 1024
          %108 = vsyncadd [#allocation6], %s107
          %s109 = sshll.u32 [#allocation5], 4
          %s110 = int_to_ptr.vmem [resolvable:$true] %s109
          %115 = dma.hbm_to_vmem [thread:$0]  %s1, 1024, %s110, [#allocation6], 64, 64, 4
        $region16: #{tpu_custom_call.1} parent=11 // pred_fallthru
          _
      $region12: #{tpu_custom_call.1} parent=5 // pred_fallthru
        _
      %p116 = scmp.lt.s32.totalorder %s15, 2
      // Predicated region
      $region17: #{tpu_custom_call.1} parent=5 // pred_check
        %p117 = pneg %p116
      $region18: #{tpu_custom_call.1} parent=5 // pred_check_branch
        %119 = sbr.rel (%p117) target = $region20
      $region19: #{tpu_custom_call.1} parent=5 // pred_region
        // Predicated region
        $region21: #{tpu_custom_call.1} parent=19 // pred_check
          %p120 = pneg %p35
        $region22: #{tpu_custom_call.1} parent=19 // pred_check_branch
          %122 = sbr.rel (%p120) target = $region24
        $region23: #{tpu_custom_call.1} parent=19 // pred_region
          %s123 = sand.u32 %s25, 1
          %s124 = scalar_lea.sflag [#allocation3], %s123
          %s125 = sand.u32 %s25, 1
          %s126 = smul.addr %s125, 4
          %s127 = scalar_lea.vmem [#allocation2], %s126
          %s129 = ssub.s32 64, 64
          %130 = vsyncadd %s124, %s129
          %s131 = smul.addr %s15, 64
          %s132 = scalar_lea.hbm %s0, %s131
          %s134 = sshll.u32 %s127, 4
          %s135 = int_to_ptr.vmem [resolvable:$true] %s134
          %137 = dma.hbm_to_vmem [thread:$0]  %s132, 64, %s135, %s124
        $region24: #{tpu_custom_call.1} parent=19 // pred_fallthru
          _
      $region20: #{tpu_custom_call.1} parent=5 // pred_fallthru
        _
      %p138 = scmp.le.s32.totalorder 1, %s15
      %p139 = scmp.lt.s32.totalorder %s15, 3
      %p140 = pnand %p138, %p139
      %p141 = pneg %p140
      // Predicated region
      $region25: #{tpu_custom_call.1} parent=5 // pred_check
        _
      $region26: #{tpu_custom_call.1} parent=5 // pred_check_branch
        %143 = sbr.rel (%p140) target = $region28
      $region27: #{tpu_custom_call.1} parent=5 // pred_region
        %s144 = ssub.s32 %s15, 1
        %s145 = sand.u32 %s28, 1
        %s146 = scalar_lea.sflag [#allocation3], %s145
        %s147 = sand.u32 %s28, 1
        %s148 = smul.addr %s147, 4
        %s149 = scalar_lea.vmem [#allocation2], %s148
        // Predicated region
        $region29: #{tpu_custom_call.1} parent=27 // pred_check
          %p150 = pneg %p41
        $region30: #{tpu_custom_call.1} parent=27 // pred_check_branch
          %152 = sbr.rel (%p150) target = $region32
        $region31: #{tpu_custom_call.1} parent=27 // pred_region
          %153 = dma.done %s146, 64
        $region32: #{tpu_custom_call.1} parent=27 // pred_fallthru
          _
        // Predicated region
        $region33: #{tpu_custom_call.1} parent=27 // pred_check
          %p154 = pneg %p62
        $region34: #{tpu_custom_call.1} parent=27 // pred_check_branch
          %156 = sbr.rel (%p154) target = $region36
        $region35: #{tpu_custom_call.1} parent=27 // pred_region
          %157 = dma.done [#allocation6], 1024
        $region36: #{tpu_custom_call.1} parent=27 // pred_fallthru
          _
        %s158 = sand.u32 %s28, 1
        %s159 = scalar_lea.sflag [#allocation3], %s158
        %s160 = sand.u32 %s28, 1
        %s161 = smul.addr %s160, 4
        %s162 = scalar_lea.vmem [#allocation2], %s161
        %p163 = pneg %p41
        %p164 = pneg %p38
        %p165 = pneg %p62
        %p166 = pneg %p59
        %p167 = pneg %p88
        %p168 = pneg %p85
        %s169 = sand.u32 %s75, 1
        %s170 = scalar_lea.sflag [#allocation4], %s169
        %s171 = sand.u32 %s75, 1
        %s172 = smul.addr %s171, 4
        %s173 = scalar_lea.vmem [#allocation7], %s172
        %v175 = vld [vmem:[%s149] sm:$0xf]
        %v176 = vld [vmem:[#allocation5] sm:$0xf]
        %v177 = vld [vmem:[#allocation5 + $0x4] sm:$0xf]
        %v178 = vld [vmem:[#allocation5 + $0x8] sm:$0xf]
        %v179 = vld [vmem:[#allocation5 + $0xc] sm:$0xf]
        %v180 = vld [vmem:[#allocation5 + $0x10] sm:$0xf]
        %v181 = vld [vmem:[#allocation5 + $0x14] sm:$0xf]
        %v182 = vld [vmem:[#allocation5 + $0x18] sm:$0xf]
        %v183 = vld [vmem:[#allocation5 + $0x1c] sm:$0xf]
        %v184 = vld [vmem:[#allocation5 + $0x20] sm:$0xf]
        %v185 = vld [vmem:[#allocation5 + $0x24] sm:$0xf]
        %v186 = vld [vmem:[#allocation5 + $0x28] sm:$0xf]
        %v187 = vld [vmem:[#allocation5 + $0x2c] sm:$0xf]
        %v188 = vld [vmem:[#allocation5 + $0x30] sm:$0xf]
        %v189 = vld [vmem:[#allocation5 + $0x34] sm:$0xf]
        %v190 = vld [vmem:[#allocation5 + $0x38] sm:$0xf]
        %v191 = vld [vmem:[#allocation5 + $0x3c] sm:$0xf]
        %v208 = vunpack.c.l.b16 %v176
        %v209 = vunpack.c.l.b16 %v177
        %v210 = vunpack.c.l.b16 %v178
        %v211 = vunpack.c.l.b16 %v179
        %v212 = vunpack.c.l.b16 %v180
        %v213 = vunpack.c.l.b16 %v181
        %v214 = vunpack.c.l.b16 %v182
        %v215 = vunpack.c.l.b16 %v183
        %v216 = vunpack.c.l.b16 %v184
        %v217 = vunpack.c.l.b16 %v185
        %v218 = vunpack.c.l.b16 %v186
        %v219 = vunpack.c.l.b16 %v187
        %v220 = vunpack.c.l.b16 %v188
        %v221 = vunpack.c.l.b16 %v189
        %v222 = vunpack.c.l.b16 %v190
        %v223 = vunpack.c.l.b16 %v191
        %v224 = vpack.c.b16 %v209, %v208
        %v225 = vpack.c.b16 %v211, %v210
        %v226 = vpack.c.b16 %v213, %v212
        %v227 = vpack.c.b16 %v215, %v214
        %v228 = vpack.c.b16 %v217, %v216
        %v229 = vpack.c.b16 %v219, %v218
        %v230 = vpack.c.b16 %v221, %v220
        %v231 = vpack.c.b16 %v223, %v222
        %240 = vmatprep.subr.bf16.mxu0 0
        %241 = vmatpush1.bf16.msra.mxu0 %v224
        %242 = vmatprep.subr.bf16.mxu0 0
        %243 = vmatpush1.bf16.msra.mxu0 %v225
        %244 = vmatprep.subr.bf16.mxu0 0
        %245 = vmatpush1.bf16.msra.mxu0 %v226
        %246 = vmatprep.subr.bf16.mxu0 0
        %247 = vmatpush1.bf16.msra.mxu0 %v227
        %248 = vmatprep.subr.bf16.mxu0 0
        %249 = vmatpush1.bf16.msra.mxu0 %v228
        %250 = vmatprep.subr.bf16.mxu0 0
        %251 = vmatpush1.bf16.msra.mxu0 %v229
        %252 = vmatprep.subr.bf16.mxu0 0
        %253 = vmatpush1.bf16.msra.mxu0 %v230
        %254 = vmatprep.subr.bf16.mxu0 0
        %255 = vmatpush1.bf16.msra.mxu0 %v231
        %256 = vmatprep.subr.bf16.mxu0 0
        %257 = vmatpush1.bf16.msra.mxu0 0
        %258 = vmatprep.subr.bf16.mxu0 0
        %259 = vmatpush1.bf16.msra.mxu0 0
        %260 = vmatprep.subr.bf16.mxu0 0
        %261 = vmatpush1.bf16.msra.mxu0 0
        %262 = vmatprep.subr.bf16.mxu0 0
        %263 = vmatpush1.bf16.msra.mxu0 0
        %264 = vmatprep.subr.bf16.mxu0 0
        %265 = vmatpush1.bf16.msra.mxu0 0
        %266 = vmatprep.subr.bf16.mxu0 0
        %267 = vmatpush1.bf16.msra.mxu0 0
        %268 = vmatprep.subr.bf16.mxu0 0
        %269 = vmatpush1.bf16.msra.mxu0 0
        %270 = vmatprep.subr.bf16.mxu0 0
        %271 = vmatpush1.bf16.msra.mxu0 0
        %272 = vmatprep.mubr.bf16.mxu0 0
        %273 = vmatmul.mubr.bf16.gmra.mrb[0].mxu0 %v175
        %v274 = vpop.f32.mrb[0].mxu0
        %v275 = vadd.f32 0.0, %v274
        %v276 = vpop.f32.mrb[0].mxu0
        %v277 = vpop.f32.mrb[0].mxu0
        %v278 = vpop.f32.mrb[0].mxu0
        %279 = vdwg.mxu0
        %v280 = vpack.c.bf16 %v275, %v275
        %281 = vst [vmem:[%s173] sm:$0xf] %v280
        %s282 = sand.u32 %s75, 1
        %s283 = scalar_lea.sflag [#allocation4], %s282
        %s284 = sand.u32 %s75, 1
        %s285 = smul.addr %s284, 4
        %s286 = scalar_lea.vmem [#allocation7], %s285
        // Predicated region
        $region37: #{tpu_custom_call.1} parent=27 // pred_check
          %p287 = pneg %p85
        $region38: #{tpu_custom_call.1} parent=27 // pred_check_branch
          %289 = sbr.rel (%p287) target = $region40
        $region39: #{tpu_custom_call.1} parent=27 // pred_region
          %s291 = ssub.s32 64, 64
          %292 = vsyncadd %s283, %s291
          %s293 = smul.addr %s20, 64
          %s294 = scalar_lea.hbm %s2, %s293
          %s296 = sshll.u32 %s286, 4
          %s297 = int_to_ptr.vmem [resolvable:$true] %s296
          %299 = dma.vmem_to_hbm [thread:$0]  %s297, 64, %s294, %s283
        $region40: #{tpu_custom_call.1} parent=27 // pred_fallthru
          _
      $region28: #{tpu_custom_call.1} parent=5 // pred_fallthru
        _
      %p300 = scmp.le.s32.totalorder 2, %s15
      // Predicated region
      $region41: #{tpu_custom_call.1} parent=5 // pred_check
        %p301 = pneg %p300
      $region42: #{tpu_custom_call.1} parent=5 // pred_check_branch
        %303 = sbr.rel (%p301) target = $region44
      $region43: #{tpu_custom_call.1} parent=5 // pred_region
        %s304 = ssub.s32 %s15, 2
        // Predicated region
        $region45: #{tpu_custom_call.1} parent=43 // pred_check
          %p305 = pneg %p91
        $region46: #{tpu_custom_call.1} parent=43 // pred_check_branch
          %307 = sbr.rel (%p305) target = $region48
        $region47: #{tpu_custom_call.1} parent=43 // pred_region
          %s308 = sand.u32 %s76, 1
          %s309 = scalar_lea.sflag [#allocation4], %s308
          %s310 = sand.u32 %s76, 1
          %s311 = smul.addr %s310, 4
          %s312 = scalar_lea.vmem [#allocation7], %s311
          %313 = dma.done %s309, 64
        $region48: #{tpu_custom_call.1} parent=43 // pred_fallthru
          _
      $region44: #{tpu_custom_call.1} parent=5 // pred_fallthru
        _
    $region6: #{tpu_custom_call.1} parent=1 // loop_footer
      %s19 = sadd.s32 1, %s15
    $region7: #{tpu_custom_call.1} parent=1 // loop_footer_branch
      %14 = sbr.rel target = $region3
    $region8: #{tpu_custom_call.1} parent=1 // loop_exit
      _
    %314 = vsyncpa [#allocation3], 1
    %s315 = scalar_lea.sflag [#allocation3], 1
    %316 = vsyncpa %s315, 1
    %317 = vsyncpa [#allocation6], 1
    %318 = vsyncpa [#allocation4], 1
    %s319 = scalar_lea.sflag [#allocation4], 1
    %320 = vsyncpa %s319, 1

</llo_original>
